<compile_context>
chip_gen: v6e
topology: v6e:2x2x1
jax: 0.10.0
libtpu: 0.0.40
codegen_flags: <defaults>
</compile_context>

<pallas_src>
import jax
import jax.numpy as jnp
from jax import lax
from jax.experimental import pallas as pl
from jax.experimental.pallas import tpu as pltpu


def _attention_kernel(dec_ref, enc_ref, w1t_ref, w2t_ref, v_ref, out_ref):
    # dec_ref : (Bt, H)     streamed decoder states (f32 or bf16)
    # enc_ref : (Bt, S, H)  streamed encoder outputs (f32 or bf16)
    # w1t_ref : (H, H)      W1^T  (x @ w1t == W1(x))
    # w2t_ref : (H, H)      W2^T
    # v_ref   : (1, H)      vt weight row, kept f32 (VPU epilogue stays f32)
    # out_ref : (Bt, S)     attention scores u_i

    # Encoder projection: one dot_general directly on the 3-D tile -> MXU
    # flattens the leading dims itself, no in-kernel reshape round-trip.
    enc_t = lax.dot_general(
        enc_ref[...], w1t_ref[...],
        dimension_numbers=(((2,), (0,)), ((), ())),
        preferred_element_type=jnp.float32)                       # (Bt, S, H) f32

    # Decoder projection for the whole block in a single matmul.
    dec_t = jnp.dot(dec_ref[...], w2t_ref[...],
                    preferred_element_type=jnp.float32)           # (Bt, H) f32

    # Broadcast-add per batch row + tanh (VPU/EUP), all in f32.
    act = jnp.tanh(enc_t + dec_t[:, None, :])                     # (Bt, S, H)

    # u[b, s] = sum_h act[b, s, h] * vt[h]  — VPU multiply + lane reduce instead
    # of an N=1 MXU matmul followed by a transpose.
    u = jnp.sum(act * v_ref[...][None, :, :], axis=-1)            # (Bt, S)
    out_ref[...] = u.astype(out_ref.dtype)


def _vmem_budget_bytes():
    """Generation-aware per-step VMEM budget."""
    try:
        cap = int(pltpu.get_tpu_info().vmem_capacity_bytes)
    except Exception:  # pragma: no cover - conservative fallback
        cap = 64 * 1024 * 1024
    if cap <= 64 * 1024 * 1024:             # v7x: 64 MiB physical -> ~48 MiB usable
        return 48 * 1024 * 1024
    return min(96 * 1024 * 1024, (cap * 3) // 4)   # v5e/v6e: 128 MiB physical


def _pick_block_b(b_pad, s, h, stream_bytes, vmem_budget,
                  target_tile_bytes=2 * 1024 * 1024):
    """Largest multiple-of-8 divisor block of b_pad such that
       (a) the streamed encoder tile stays near the ~1-4 MiB HBM sweet spot,
       (b) the estimated per-step VMEM footprint fits `vmem_budget`, and
       (c) at least min(4, nblocks) grid steps remain for pipelining /
           megacore sharding."""
    n8 = b_pad // 8
    enc_stream_per8 = 8 * s * h * stream_bytes
    # 2x streamed enc (double buffer) + ~3x f32 intermediates (enc_t/act/u)
    # + 2x out block + 2x streamed dec, per 8 batch rows.
    footprint_per8 = (8 * s * h * (2 * stream_bytes + 3 * 4)
                      + 2 * 8 * s * 4 + 2 * 8 * h * stream_bytes)
    fixed = 4 * h * h * stream_bytes + 2 * h * 4 + (1 << 20)       # weights + slack
    min_steps = min(4, n8)
    best = 1
    for d in range(1, n8 + 1):
        if n8 % d:
            continue
        if n8 // d < min_steps:
            break                      # divisors ascend -> steps only shrink
        if d * enc_stream_per8 > target_tile_bytes:
            continue
        if fixed + d * footprint_per8 > vmem_budget:
            continue
        best = d
    return 8 * best


def attention_forward(decoder_state, encoder_outputs, w1, w2, vt, *,
                      block_b=None, use_bf16=True):
    """decoder_state: (B, H), encoder_outputs: (B, S, H),
       w1: (H, H), w2: (H, H), vt: (1, H)  (PyTorch nn.Linear weight layouts).
       Returns u_i: (B, S) float32."""
    B, S, H = encoder_outputs.shape
    assert decoder_state.shape == (B, H)

    stream_dtype = jnp.bfloat16 if use_bf16 else jnp.float32
    stream_bytes = 2 if use_bf16 else 4

    # Pad the batch to a multiple of 8 (f32 sublane tile) instead of letting a
    # ragged / tiny B force one giant un-pipelined block.
    B_pad = max(8, ((B + 7) // 8) * 8)
    if B_pad != B:
        pad = B_pad - B
        decoder_state = jnp.pad(decoder_state, ((0, pad), (0, 0)))
        encoder_outputs = jnp.pad(encoder_outputs, ((0, pad), (0, 0), (0, 0)))

    vmem_budget = _vmem_budget_bytes()
    if block_b is None:
        block_b = _pick_block_b(B_pad, S, H, stream_bytes, vmem_budget)
    assert B_pad % block_b == 0 and block_b % 8 == 0
    grid = (B_pad // block_b,)

    # Streamed operands: bf16 halves the dominant HBM read stream; both matmuls
    # accumulate in f32 and the epilogue stays f32.
    dec = decoder_state.astype(stream_dtype)
    enc = encoder_outputs.astype(stream_dtype)
    w1t = w1.T.astype(stream_dtype)
    w2t = w2.T.astype(stream_dtype)
    vt_f32 = vt.astype(jnp.float32)

    # Resident weights: constant index_map -> no need for a second pipeline
    # buffer once the HxH weight is big enough to matter.
    weight_kw = dict(pipeline_mode=pl.Buffered(1)) if H >= 256 else {}
    w_spec = pl.BlockSpec((H, H), lambda b: (0, 0), **weight_kw)
    v_spec = pl.BlockSpec((1, H), lambda b: (0, 0), **weight_kw)

    out = pl.pallas_call(
        _attention_kernel,
        out_shape=jax.ShapeDtypeStruct((B_pad, S), jnp.float32),
        grid_spec=pltpu.PrefetchScalarGridSpec(
            num_scalar_prefetch=0,
            grid=grid,
            in_specs=[
                pl.BlockSpec((block_b, H), lambda b: (b, 0)),        # decoder_state
                pl.BlockSpec((block_b, S, H), lambda b: (b, 0, 0)),  # encoder_outputs
                w_spec,                                              # W1^T (resident)
                w_spec,                                              # W2^T (resident)
                v_spec,                                              # vt row (f32)
            ],
            out_specs=pl.BlockSpec((block_b, S), lambda b: (b, 0)),
        ),
        compiler_params=pltpu.CompilerParams(
            dimension_semantics=("parallel",),
            vmem_limit_bytes=vmem_budget),
    )(dec, enc, w1t, w2t, vt_f32)

    return out[:B] if B_pad != B else out
    # TODO(synk): if S grows large with small H, keep S as the lane axis in the
    # epilogue so the (Bt, S) store stays on the unmasked lane-dense vst path.


if __name__ == "__main__":
    B, S, H = 2, 8, 32

    key = jax.random.PRNGKey(0)
    k_dec, k_enc, k_w1, k_w2, k_vt = jax.random.split(key, 5)

    # Deterministic parameter init (uniform(-1/sqrt(H), 1/sqrt(H)), like nn.Linear).
    bound = 1.0 / jnp.sqrt(jnp.float32(H))
    w1 = jax.random.uniform(k_w1, (H, H), jnp.float32, -bound, bound)
    w2 = jax.random.uniform(k_w2, (H, H), jnp.float32, -bound, bound)
    vt = jax.random.uniform(k_vt, (1, H), jnp.float32, -bound, bound)

    decoder_state = jax.random.normal(k_dec, (B, H), jnp.float32)
    encoder_outputs = jax.random.normal(k_enc, (B, S, H), jnp.float32)

    # Pure-JAX reference.
    ref = jnp.squeeze(
        jnp.tanh(encoder_outputs @ w1.T + (decoder_state @ w2.T)[:, None, :]) @ vt.T,
        axis=-1,
    )

    # Exact f32 path (tight tolerance).
    u_f32 = jax.block_until_ready(
        attention_forward(decoder_state, encoder_outputs, w1, w2, vt, use_bf16=False))
    assert u_f32.shape == (B, S)
    assert jnp.allclose(u_f32, ref, atol=1e-5, rtol=1e-5)

    # bf16-streamed path (default, halves HBM reads) — f32 accumulation, looser tol.
    u_bf16 = jax.block_until_ready(
        attention_forward(decoder_state, encoder_outputs, w1, w2, vt, use_bf16=True))
    assert u_bf16.shape == (B, S)
    assert jnp.allclose(u_bf16, ref, atol=2e-2, rtol=2e-2)

    print("KERNEL_OK")
</pallas_src>

<mosaic_0001>
module attributes {stable_mosaic.version = 11 : i64} {
  func.func @_attention_kernel(%arg0: i32, %arg1: memref<8x32xf32, #tpu.memory_space<vmem>>, %arg2: memref<8x8x32xf32, #tpu.memory_space<vmem>>, %arg3: memref<32x32xf32, #tpu.memory_space<vmem>>, %arg4: memref<32x32xf32, #tpu.memory_space<vmem>>, %arg5: memref<1x32xf32, #tpu.memory_space<vmem>>, %arg6: memref<8x8xf32, #tpu.memory_space<vmem>>) attributes {dimension_semantics = [#tpu.dimension_semantics<parallel>], iteration_bounds = array<i64: 1>, scalar_prefetch = 0 : i64, scratch_operands = 0 : i64, tpu.core_type = #tpu.core_type<tc>, window_params = [{transform_indices = @transform_0, window_bounds = array<i64: 8, 32>}, {transform_indices = @transform_1, window_bounds = array<i64: 8, 8, 32>}, {pipeline_mode = #tpu.pipeline_mode<synchronous>, transform_indices = @transform_2, window_bounds = array<i64: 32, 32>}, {pipeline_mode = #tpu.pipeline_mode<synchronous>, transform_indices = @transform_3, window_bounds = array<i64: 32, 32>}, {pipeline_mode = #tpu.pipeline_mode<synchronous>, transform_indices = @transform_4, window_bounds = array<i64: 1, 32>}, {transform_indices = @transform_5, window_bounds = array<i64: 8, 8>}]} {
    %c0 = arith.constant 0 : index
    %c0_0 = arith.constant 0 : index
    %c0_1 = arith.constant 0 : index
    %0 = vector.load %arg2[%c0, %c0_0, %c0_1] : memref<8x8x32xf32, #tpu.memory_space<vmem>>, vector<8x8x32xf32>
    %c0_2 = arith.constant 0 : index
    %c0_3 = arith.constant 0 : index
    %1 = vector.load %arg3[%c0_2, %c0_3] : memref<32x32xf32, #tpu.memory_space<vmem>>, vector<32x32xf32>
    %cst = arith.constant dense<0.000000e+00> : vector<8x8x32xf32>
    %2 = tpu.matmul %0, %1, %cst {dimension_numbers = #tpu.dot_dimension_numbers<[2], [0], [0, 1], [1], [0, 0, 0, 1, 1, 1], [], []>} : vector<8x8x32xf32>, vector<32x32xf32>, vector<8x8x32xf32> -> vector<8x8x32xf32>
    %c0_4 = arith.constant 0 : index
    %c0_5 = arith.constant 0 : index
    %3 = vector.load %arg1[%c0_4, %c0_5] : memref<8x32xf32, #tpu.memory_space<vmem>>, vector<8x32xf32>
    %c0_6 = arith.constant 0 : index
    %c0_7 = arith.constant 0 : index
    %4 = vector.load %arg4[%c0_6, %c0_7] : memref<32x32xf32, #tpu.memory_space<vmem>>, vector<32x32xf32>
    %cst_8 = arith.constant dense<0.000000e+00> : vector<8x32xf32>
    %5 = tpu.matmul %3, %4, %cst_8 {dimension_numbers = #tpu.dot_dimension_numbers<[1], [0], [0], [1], [0, 0, 1, 1], [], []>} : vector<8x32xf32>, vector<32x32xf32>, vector<8x32xf32> -> vector<8x32xf32>
    %6 = vector.shape_cast %5 : vector<8x32xf32> to vector<8x1x32xf32>
    %7 = vector.broadcast %6 : vector<8x1x32xf32> to vector<8x8x32xf32>
    %8 = arith.addf %2, %7 : vector<8x8x32xf32>
    %9 = math.tanh %8 : vector<8x8x32xf32>
    %c0_9 = arith.constant 0 : index
    %c0_10 = arith.constant 0 : index
    %10 = vector.load %arg5[%c0_9, %c0_10] : memref<1x32xf32, #tpu.memory_space<vmem>>, vector<1x32xf32>
    %11 = vector.shape_cast %10 : vector<1x32xf32> to vector<1x1x32xf32>
    %12 = vector.broadcast %11 : vector<1x1x32xf32> to vector<8x8x32xf32>
    %13 = arith.mulf %9, %12 : vector<8x8x32xf32>
    %cst_11 = arith.constant dense<0.000000e+00> : vector<8x8xf32>
    %14 = vector.multi_reduction <add>, %13, %cst_11 [2] : vector<8x8x32xf32> to vector<8x8xf32>
    %c0_12 = arith.constant 0 : index
    %c0_13 = arith.constant 0 : index
    %15 = vector.load %arg6[%c0_12, %c0_13] : memref<8x8xf32, #tpu.memory_space<vmem>>, vector<8x8xf32>
    tpu.vector_store %arg6[%c0_12, %c0_13], %14 {strides = array<i32>} : memref<8x8xf32, #tpu.memory_space<vmem>>, vector<8x8xf32>,
    return
  }
  func.func @transform_0(%arg0: i32) -> (i32, i32) {
    %c0_i32 = arith.constant 0 : i32
    %c0_i32_0 = arith.constant 0 : i32
    return %arg0, %c0_i32 : i32, i32
  }
  func.func @transform_1(%arg0: i32) -> (i32, i32, i32) {
    %c0_i32 = arith.constant 0 : i32
    %c0_i32_0 = arith.constant 0 : i32
    %c0_i32_1 = arith.constant 0 : i32
    return %arg0, %c0_i32, %c0_i32_0 : i32, i32, i32
  }
  func.func @transform_2(%arg0: i32) -> (i32, i32) {
    %c0_i32 = arith.constant 0 : i32
    %c0_i32_0 = arith.constant 0 : i32
    %c0_i32_1 = arith.constant 0 : i32
    return %c0_i32, %c0_i32_0 : i32, i32
  }
  func.func @transform_3(%arg0: i32) -> (i32, i32) {
    %c0_i32 = arith.constant 0 : i32
    %c0_i32_0 = arith.constant 0 : i32
    %c0_i32_1 = arith.constant 0 : i32
    return %c0_i32, %c0_i32_0 : i32, i32
  }
  func.func @transform_4(%arg0: i32) -> (i32, i32) {
    %c0_i32 = arith.constant 0 : i32
    %c0_i32_0 = arith.constant 0 : i32
    %c0_i32_1 = arith.constant 0 : i32
    return %c0_i32, %c0_i32_0 : i32, i32
  }
  func.func @transform_5(%arg0: i32) -> (i32, i32) {
    %c0_i32 = arith.constant 0 : i32
    %c0_i32_0 = arith.constant 0 : i32
    return %arg0, %c0_i32 : i32, i32
  }
}

</mosaic_0001>

<llo_original>
// kernel: tpu_custom_call.1
$region0: #{tpu_custom_call.1}
  #allocation0 [shape = 'u32[]', space=smem, size = 0x4, offset = 0x4, fixed_abs, tag = 'smem constant byte address 0x4 - core index']
  #allocation1 [shape = 'u32[144,128]{1,0:T(1,128)}', space=vmem, size = 0x12000, scoped, tag = 'internal scratch']
  %s0 = inlined_call_operand.hbm [shape: f32[8,32], index: 0, kind: input, shape index: {}]
  %s1 = inlined_call_operand.hbm [shape: f32[8,8,32], index: 1, kind: input, shape index: {}]
  %s2 = inlined_call_operand.hbm [shape: f32[32,32], index: 2, kind: input, shape index: {}]
  %s3 = inlined_call_operand.hbm [shape: f32[32,32], index: 3, kind: input, shape index: {}]
  %s4 = inlined_call_operand.vmem [shape: f32[1,32], index: 4, kind: input, shape index: {}]
  %s5 = inlined_call_operand.hbm [shape: f32[8,8], index: 5, kind: output, shape index: {}]
  %s6 = sld [smem:[#allocation0]]
  $region46: #{tpu_custom_call.1} parent=0
    _
  %s8 = ssub.s32 1, %s6
  %s9 = scalar_select 0, %s8, %s6
  $region1: #{tpu_custom_call.1} parent=0
    #allocation2 [shape = 'u8[4096]{0}', space=vmem, size = 0x1000, scoped, tag = 'input window, operand 0, single buffered']
    #allocation3 [shape = 's32[1]{0}', space=sflag, size = 0x4, scoped, tag = 'scoped memory for tpu_custom_call.1']
    #allocation4 [shape = 's32[1]{0}', space=sflag, size = 0x4, scoped, tag = 'scoped memory for tpu_custom_call.1']
    #allocation5 [shape = 'u8[32768]{0}', space=vmem, size = 0x8000, scoped, tag = 'input window, operand 1, single buffered']
    #allocation6 [shape = 's32[1]{0}', space=sflag, size = 0x4, scoped, tag = 'scoped memory for tpu_custom_call.1']
    #allocation7 [shape = 'u8[16384]{0}', space=vmem, size = 0x4000, scoped, tag = 'input window, operand 2, single buffered']
    #allocation8 [shape = 'u8[16384]{0}', space=vmem, size = 0x4000, scoped, tag = 'input window, operand 3, single buffered']
    #allocation9 [shape = 's32[1]{0}', space=sflag, size = 0x4, scoped, tag = 'scoped memory for tpu_custom_call.1']
    #allocation10 [shape = 'u8[4096]{0}', space=vmem, size = 0x1000, scoped, tag = 'output window, operand 0, single buffered']
    %10 = vsyncpa [#allocation3], 0
    %11 = vsyncpa [#allocation6], 0
    %12 = vsyncpa [#allocation9], 0
    %13 = vsyncpa [#allocation4], 0
    // Predicated region
    $region2: #{tpu_custom_call.1} parent=1 // pred_check
      _
    $region3: #{tpu_custom_call.1} parent=1 // pred_check_branch
      %15 = sbr.rel (0) target = $region5
    $region4: #{tpu_custom_call.1} parent=1 // pred_region
      %s17 = ssub.s32 128, 128
      %18 = vsyncadd [#allocation3], %s17
      %s20 = sshll.u32 [#allocation2], 4
      %s21 = int_to_ptr.vmem [resolvable:$true] %s20
      %23 = dma.hbm_to_vmem [thread:$0]  %s0, 128, %s21, [#allocation3]
    $region5: #{tpu_custom_call.1} parent=1 // pred_fallthru
      _
    // Predicated region
    $region6: #{tpu_custom_call.1} parent=1 // pred_check
      _
    $region7: #{tpu_custom_call.1} parent=1 // pred_check_branch
      %25 = sbr.rel (0) target = $region9
    $region8: #{tpu_custom_call.1} parent=1 // pred_region
      %s27 = ssub.s32 1024, 1024
      %28 = vsyncadd [#allocation6], %s27
      %s29 = sshll.u32 [#allocation5], 4
      %s30 = int_to_ptr.vmem [resolvable:$true] %s29
      %35 = dma.hbm_to_vmem [thread:$0]  %s1, 1024, %s30, [#allocation6], 128, 128, 8
    $region9: #{tpu_custom_call.1} parent=1 // pred_fallthru
      _
    // Predicated region
    $region10: #{tpu_custom_call.1} parent=1 // pred_check
      _
    $region11: #{tpu_custom_call.1} parent=1 // pred_check_branch
      %37 = sbr.rel (0) target = $region13
    $region12: #{tpu_custom_call.1} parent=1 // pred_region
      %s39 = ssub.s32 512, 512
      %40 = vsyncadd [#allocation6], %s39
      %s41 = sshll.u32 [#allocation7], 4
      %s42 = int_to_ptr.vmem [resolvable:$true] %s41
      %47 = dma.hbm_to_vmem [thread:$0]  %s2, 512, %s42, [#allocation6], 128, 128, 8
    $region13: #{tpu_custom_call.1} parent=1 // pred_fallthru
      _
    // Predicated region
    $region14: #{tpu_custom_call.1} parent=1 // pred_check
      _
    $region15: #{tpu_custom_call.1} parent=1 // pred_check_branch
      %49 = sbr.rel (0) target = $region17
    $region16: #{tpu_custom_call.1} parent=1 // pred_region
      %s51 = ssub.s32 512, 512
      %52 = vsyncadd [#allocation9], %s51
      %s53 = sshll.u32 [#allocation8], 4
      %s54 = int_to_ptr.vmem [resolvable:$true] %s53
      %59 = dma.hbm_to_vmem [thread:$0]  %s3, 512, %s54, [#allocation9], 128, 128, 8
    $region17: #{tpu_custom_call.1} parent=1 // pred_fallthru
      _
    // Predicated region
    $region18: #{tpu_custom_call.1} parent=1 // pred_check
      _
    $region19: #{tpu_custom_call.1} parent=1 // pred_check_branch
      %61 = sbr.rel (0) target = $region21
    $region20: #{tpu_custom_call.1} parent=1 // pred_region
      _
    $region21: #{tpu_custom_call.1} parent=1 // pred_fallthru
      _
    // Predicated region
    $region22: #{tpu_custom_call.1} parent=1 // pred_check
      _
    $region23: #{tpu_custom_call.1} parent=1 // pred_check_branch
      %63 = sbr.rel (0) target = $region25
    $region24: #{tpu_custom_call.1} parent=1 // pred_region
      %64 = dma.done [#allocation3], 128
    $region25: #{tpu_custom_call.1} parent=1 // pred_fallthru
      _
    // Predicated region
    $region26: #{tpu_custom_call.1} parent=1 // pred_check
      _
    $region27: #{tpu_custom_call.1} parent=1 // pred_check_branch
      %66 = sbr.rel (0) target = $region29
    $region28: #{tpu_custom_call.1} parent=1 // pred_region
      %67 = dma.done [#allocation6], 1024
    $region29: #{tpu_custom_call.1} parent=1 // pred_fallthru
      _
    // Predicated region
    $region30: #{tpu_custom_call.1} parent=1 // pred_check
      _
    $region31: #{tpu_custom_call.1} parent=1 // pred_check_branch
      %69 = sbr.rel (0) target = $region33
    $region32: #{tpu_custom_call.1} parent=1 // pred_region
      %70 = dma.done [#allocation6], 512
    $region33: #{tpu_custom_call.1} parent=1 // pred_fallthru
      _
    // Predicated region
    $region34: #{tpu_custom_call.1} parent=1 // pred_check
      _
    $region35: #{tpu_custom_call.1} parent=1 // pred_check_branch
      %72 = sbr.rel (0) target = $region37
    $region36: #{tpu_custom_call.1} parent=1 // pred_region
      %73 = dma.done [#allocation9], 512
    $region37: #{tpu_custom_call.1} parent=1 // pred_fallthru
      _
    %v74 = vld [vmem:[#allocation5] sm:$0xff]
    %v75 = vld [vmem:[#allocation5 + $0x8] sm:$0xff]
    %v76 = vld [vmem:[#allocation5 + $0x10] sm:$0xff]
    %v77 = vld [vmem:[#allocation5 + $0x18] sm:$0xff]
    %v78 = vld [vmem:[#allocation5 + $0x20] sm:$0xff]
    %v79 = vld [vmem:[#allocation5 + $0x28] sm:$0xff]
    %v80 = vld [vmem:[#allocation5 + $0x30] sm:$0xff]
    %v81 = vld [vmem:[#allocation5 + $0x38] sm:$0xff]
    %v82 = vld [vmem:[#allocation7] sm:$0xff]
    %v83 = vld [vmem:[#allocation7 + $0x8] sm:$0xff]
    %v84 = vld [vmem:[#allocation7 + $0x10] sm:$0xff]
    %v85 = vld [vmem:[#allocation7 + $0x18] sm:$0xff]
    %v86 = vld [vmem:[#allocation2] sm:$0xff]
    %v87 = vld [vmem:[#allocation8] sm:$0xff]
    %v88 = vld [vmem:[#allocation8 + $0x8] sm:$0xff]
    %v89 = vld [vmem:[#allocation8 + $0x10] sm:$0xff]
    %v90 = vld [vmem:[#allocation8 + $0x18] sm:$0xff]
    %vm91 = vcmask 261120
    %v93 = vsel %vm91, %v86, 0
    %95 = vmatprep.subr.mxu0 0.0
    %96 = vmatpush1.msra.mxu0 0.0
    %97 = vmatprep.subr.mxu0 0.0
    %98 = vmatpush1.msra.mxu0 0.0
    %99 = vmatprep.subr.mxu0 0.0
    %100 = vmatpush1.msra.mxu0 0.0
    %101 = vmatprep.subr.mxu0 0.0
    %102 = vmatpush1.msra.mxu0 0.0
    %103 = vmatprep.subr.mxu0 0.0
    %104 = vmatpush1.msra.mxu0 0.0
    %105 = vmatprep.subr.mxu0 0.0
    %106 = vmatpush1.msra.mxu0 0.0
    %107 = vmatprep.subr.mxu0 0.0
    %108 = vmatpush1.msra.mxu0 0.0
    %109 = vmatprep.subr.mxu0 0.0
    %110 = vmatpush1.msra.mxu0 0.0
    %111 = vmatprep.subr.mxu0 0.0
    %112 = vmatpush1.msra.mxu0 0.0
    %113 = vmatprep.subr.mxu0 0.0
    %114 = vmatpush1.msra.mxu0 0.0
    %115 = vmatprep.subr.mxu0 0.0
    %116 = vmatpush1.msra.mxu0 0.0
    %117 = vmatprep.subr.mxu0 0.0
    %118 = vmatpush1.msra.mxu0 0.0
    %119 = vmatprep.subr.mxu0 0.0
    %120 = vmatpush1.msra.mxu0 %v90
    %121 = vmatprep.subr.mxu0 0.0
    %122 = vmatpush1.msra.mxu0 %v89
    %123 = vmatprep.subr.mxu0 0.0
    %124 = vmatpush1.msra.mxu0 %v88
    %125 = vmatprep.subr.mxu0 0.0
    %126 = vmatpush1.msra.mxu0 %v87
    %127 = vmatprep.subr.mxu0 0.0
    %128 = vmatpush2.msra.mxu0 0.0
    %129 = vmatprep.subr.mxu0 0.0
    %130 = vmatpush2.msra.mxu0 0.0
    %131 = vmatprep.subr.mxu0 0.0
    %132 = vmatpush2.msra.mxu0 0.0
    %133 = vmatprep.subr.mxu0 0.0
    %134 = vmatpush2.msra.mxu0 0.0
    %135 = vmatprep.subr.mxu0 0.0
    %136 = vmatpush2.msra.mxu0 0.0
    %137 = vmatprep.subr.mxu0 0.0
    %138 = vmatpush2.msra.mxu0 0.0
    %139 = vmatprep.subr.mxu0 0.0
    %140 = vmatpush2.msra.mxu0 0.0
    %141 = vmatprep.subr.mxu0 0.0
    %142 = vmatpush2.msra.mxu0 0.0
    %143 = vmatprep.subr.mxu0 0.0
    %144 = vmatpush2.msra.mxu0 0.0
    %145 = vmatprep.subr.mxu0 0.0
    %146 = vmatpush2.msra.mxu0 0.0
    %147 = vmatprep.subr.mxu0 0.0
    %148 = vmatpush2.msra.mxu0 0.0
    %149 = vmatprep.subr.mxu0 0.0
    %150 = vmatpush2.msra.mxu0 0.0
    %151 = vmatprep.subr.mxu0 0.0
    %152 = vmatpush2.msra.mxu0 0.0
    %153 = vmatprep.subr.mxu0 0.0
    %154 = vmatpush2.msra.mxu0 0.0
    %155 = vmatprep.subr.mxu0 0.0
    %156 = vmatpush2.msra.mxu0 0.0
    %157 = vmatprep.subr.mxu0 0.0
    %158 = vmatpush2.msra.mxu0 0.0
    %159 = vmatprep.mubr.f32.mxu0 0.0
    %160 = vmatmul.mubr.f32.gmra.mxu0 %v93
    %v161 = vpop.f32.mrf.mxu0
    %v162 = vadd.f32 0.0, %v161
    %v163 = vpop.f32.mrf.mxu0
    %164 = vdwg.mxu0
    %v166 = vcombine.high %v162, %v162
    %v168 = vunpack.c.l.s4 1966171168
    %v169 = vunpack.c.0.s8 %v168
    %v170 = vlaneseq
    %v171 = vshrl.u32 %v170, 7
    %v172 = vsub.s32 %v169, %v171
    %v173 = vrot.slane %v162, %v172
    %v175 = vunpack.c.l.s4 1966171168
    %v176 = vunpack.c.0.s8 %v175
    %v177 = vlaneseq
    %v178 = vshrl.u32 %v177, 7
    %v179 = vsub.s32 %v176, %v178
    %v180 = vrot.slane %v166, %v179
    %v181 = vcombine.high %v173, %v173
    %v182 = vcombine.high %v180, %v180
    %v184 = vunpack.c.l.s4 1966171168
    %v185 = vunpack.c.0.s8 %v184
    %v186 = vlaneseq
    %v187 = vshrl.u32 %v186, 7
    %v188 = vsub.s32 %v185, %v187
    %v189 = vrot.slane %v173, %v188
    %v191 = vunpack.c.l.s4 1966171168
    %v192 = vunpack.c.0.s8 %v191
    %v193 = vlaneseq
    %v194 = vshrl.u32 %v193, 7
    %v195 = vsub.s32 %v192, %v194
    %v196 = vrot.slane %v180, %v195
    %v198 = vunpack.c.l.s4 1966171168
    %v199 = vunpack.c.0.s8 %v198
    %v200 = vlaneseq
    %v201 = vshrl.u32 %v200, 7
    %v202 = vsub.s32 %v199, %v201
    %v203 = vrot.slane %v181, %v202
    %v205 = vunpack.c.l.s4 1966171168
    %v206 = vunpack.c.0.s8 %v205
    %v207 = vlaneseq
    %v208 = vshrl.u32 %v207, 7
    %v209 = vsub.s32 %v206, %v208
    %v210 = vrot.slane %v182, %v209
    %v211 = vcombine.high %v189, %v189
    %v212 = vcombine.high %v196, %v196
    %v213 = vcombine.high %v203, %v203
    %v214 = vcombine.high %v210, %v210
    %v215 = vlaneseq
    %v216 = vshrl.u32 %v215, 7
    %v217 = vsub.s32 0, %v216
    %v218 = vrot.slane %v189, %v217
    %v219 = vlaneseq
    %v220 = vshrl.u32 %v219, 7
    %v221 = vsub.s32 0, %v220
    %v222 = vrot.slane %v203, %v221
    %v223 = vlaneseq
    %v224 = vshrl.u32 %v223, 7
    %v225 = vsub.s32 0, %v224
    %v226 = vrot.slane %v211, %v225
    %v227 = vlaneseq
    %v228 = vshrl.u32 %v227, 7
    %v229 = vsub.s32 0, %v228
    %v230 = vrot.slane %v213, %v229
    %v231 = vlaneseq
    %v232 = vshrl.u32 %v231, 7
    %v233 = vsub.s32 0, %v232
    %v234 = vrot.slane %v196, %v233
    %v235 = vlaneseq
    %v236 = vshrl.u32 %v235, 7
    %v237 = vsub.s32 0, %v236
    %v238 = vrot.slane %v210, %v237
    %v239 = vlaneseq
    %v240 = vshrl.u32 %v239, 7
    %v241 = vsub.s32 0, %v240
    %v242 = vrot.slane %v212, %v241
    %v243 = vlaneseq
    %v244 = vshrl.u32 %v243, 7
    %v245 = vsub.s32 0, %v244
    %v246 = vrot.slane %v214, %v245
    %v256 = vsel %vm91, %v74, 0
    %v259 = vsel %vm91, %v75, 0
    %v262 = vsel %vm91, %v76, 0
    %v265 = vsel %vm91, %v77, 0
    %v268 = vsel %vm91, %v78, 0
    %v271 = vsel %vm91, %v79, 0
    %v274 = vsel %vm91, %v80, 0
    %v277 = vsel %vm91, %v81, 0
    %279 = vmatprep.subr.mxu0 0.0
    %280 = vmatpush1.msra.mxu0 0.0
    %281 = vmatprep.subr.mxu0 0.0
    %282 = vmatpush1.msra.mxu0 0.0
    %283 = vmatprep.subr.mxu0 0.0
    %284 = vmatpush1.msra.mxu0 0.0
    %285 = vmatprep.subr.mxu0 0.0
    %286 = vmatpush1.msra.mxu0 0.0
    %287 = vmatprep.subr.mxu0 0.0
    %288 = vmatpush1.msra.mxu0 0.0
    %289 = vmatprep.subr.mxu0 0.0
    %290 = vmatpush1.msra.mxu0 0.0
    %291 = vmatprep.subr.mxu0 0.0
    %292 = vmatpush1.msra.mxu0 0.0
    %293 = vmatprep.subr.mxu0 0.0
    %294 = vmatpush1.msra.mxu0 0.0
    %295 = vmatprep.subr.mxu0 0.0
    %296 = vmatpush1.msra.mxu0 0.0
    %297 = vmatprep.subr.mxu0 0.0
    %298 = vmatpush1.msra.mxu0 0.0
    %299 = vmatprep.subr.mxu0 0.0
    %300 = vmatpush1.msra.mxu0 0.0
    %301 = vmatprep.subr.mxu0 0.0
    %302 = vmatpush1.msra.mxu0 0.0
    %303 = vmatprep.subr.mxu0 0.0
    %304 = vmatpush1.msra.mxu0 %v85
    %305 = vmatprep.subr.mxu0 0.0
    %306 = vmatpush1.msra.mxu0 %v84
    %307 = vmatprep.subr.mxu0 0.0
    %308 = vmatpush1.msra.mxu0 %v83
    %309 = vmatprep.subr.mxu0 0.0
    %310 = vmatpush1.msra.mxu0 %v82
    %311 = vmatprep.subr.mxu0 0.0
    %312 = vmatpush2.msra.mxu0 0.0
    %313 = vmatprep.subr.mxu0 0.0
    %314 = vmatpush2.msra.mxu0 0.0
    %315 = vmatprep.subr.mxu0 0.0
    %316 = vmatpush2.msra.mxu0 0.0
    %317 = vmatprep.subr.mxu0 0.0
    %318 = vmatpush2.msra.mxu0 0.0
    %319 = vmatprep.subr.mxu0 0.0
    %320 = vmatpush2.msra.mxu0 0.0
    %321 = vmatprep.subr.mxu0 0.0
    %322 = vmatpush2.msra.mxu0 0.0
    %323 = vmatprep.subr.mxu0 0.0
    %324 = vmatpush2.msra.mxu0 0.0
    %325 = vmatprep.subr.mxu0 0.0
    %326 = vmatpush2.msra.mxu0 0.0
    %327 = vmatprep.subr.mxu0 0.0
    %328 = vmatpush2.msra.mxu0 0.0
    %329 = vmatprep.subr.mxu0 0.0
    %330 = vmatpush2.msra.mxu0 0.0
    %331 = vmatprep.subr.mxu0 0.0
    %332 = vmatpush2.msra.mxu0 0.0
    %333 = vmatprep.subr.mxu0 0.0
    %334 = vmatpush2.msra.mxu0 0.0
    %335 = vmatprep.subr.mxu0 0.0
    %336 = vmatpush2.msra.mxu0 0.0
    %337 = vmatprep.subr.mxu0 0.0
    %338 = vmatpush2.msra.mxu0 0.0
    %339 = vmatprep.subr.mxu0 0.0
    %340 = vmatpush2.msra.mxu0 0.0
    %341 = vmatprep.subr.mxu0 0.0
    %342 = vmatpush2.msra.mxu0 0.0
    %343 = vmatprep.mubr.f32.mxu0 0.0
    %344 = vmatmul.mubr.f32.gmra.mxu0 %v256
    %v345 = vpop.f32.mrf.mxu0
    %v346 = vadd.f32 %v218, %v345
    %v347 = vpop.f32.mrf.mxu0
    %348 = vmatprep.mubr.f32.mxu0 0.0
    %349 = vmatmul.mubr.f32.gmra.mxu0 %v259
    %v350 = vpop.f32.mrf.mxu0
    %v351 = vadd.f32 %v222, %v350
    %v352 = vpop.f32.mrf.mxu0
    %353 = vmatprep.mubr.f32.mxu0 0.0
    %354 = vmatmul.mubr.f32.gmra.mxu0 %v262
    %v355 = vpop.f32.mrf.mxu0
    %v356 = vadd.f32 %v226, %v355
    %v357 = vpop.f32.mrf.mxu0
    %358 = vmatprep.mubr.f32.mxu0 0.0
    %359 = vmatmul.mubr.f32.gmra.mxu0 %v265
    %v360 = vpop.f32.mrf.mxu0
    %v361 = vadd.f32 %v230, %v360
    %v362 = vpop.f32.mrf.mxu0
    %363 = vmatprep.mubr.f32.mxu0 0.0
    %364 = vmatmul.mubr.f32.gmra.mxu0 %v268
    %v365 = vpop.f32.mrf.mxu0
    %v366 = vadd.f32 %v234, %v365
    %v367 = vpop.f32.mrf.mxu0
    %368 = vmatprep.mubr.f32.mxu0 0.0
    %369 = vmatmul.mubr.f32.gmra.mxu0 %v271
    %v370 = vpop.f32.mrf.mxu0
    %v371 = vadd.f32 %v238, %v370
    %v372 = vpop.f32.mrf.mxu0
    %373 = vmatprep.mubr.f32.mxu0 0.0
    %374 = vmatmul.mubr.f32.gmra.mxu0 %v274
    %v375 = vpop.f32.mrf.mxu0
    %v376 = vadd.f32 %v242, %v375
    %v377 = vpop.f32.mrf.mxu0
    %378 = vmatprep.mubr.f32.mxu0 0.0
    %379 = vmatmul.mubr.f32.gmra.mxu0 %v277
    %v380 = vpop.f32.mrf.mxu0
    %v381 = vadd.f32 %v246, %v380
    %v382 = vpop.f32.mrf.mxu0
    %383 = vdwg.mxu0
    %v384 = vtanh.pop %v346
    %v385 = vtanh.pop %v351
    %v386 = vtanh.pop %v356
    %v387 = vtanh.pop %v361
    %v388 = vtanh.pop %v366
    %v389 = vtanh.pop %v371
    %v390 = vtanh.pop %v376
    %v391 = vtanh.pop %v381
    %v392 = vld [vmem:[%s4] sm:$0x1]
    %v394 = vlaneseq
    %v395 = vshrl.u32 %v394, 7
    %v396 = vsub.s32 0, %v395
    %v397 = vrot.slane %v392, %v396
    %v399 = vmul.f32 %v384, %v397
    %v400 = vmul.f32 %v385, %v397
    %v401 = vmul.f32 %v386, %v397
    %v402 = vmul.f32 %v387, %v397
    %v403 = vmul.f32 %v388, %v397
    %v404 = vmul.f32 %v389, %v397
    %v405 = vmul.f32 %v390, %v397
    %v406 = vmul.f32 %v391, %v397
    %v407 = vsel %vm91, %v399, 0.0
    %408 = vadd.xlane.f32.xlu0 %v407
    %v409 = vpop.xlane.xlu0 %408
    %v410 = vsel %vm91, %v400, 0.0
    %411 = vadd.xlane.f32.xlu0 %v410
    %v412 = vpop.xlane.xlu0 %411
    %v413 = vsel %vm91, %v401, 0.0
    %414 = vadd.xlane.f32.xlu0 %v413
    %v415 = vpop.xlane.xlu0 %414
    %v416 = vsel %vm91, %v402, 0.0
    %417 = vadd.xlane.f32.xlu0 %v416
    %v418 = vpop.xlane.xlu0 %417
    %v419 = vsel %vm91, %v403, 0.0
    %420 = vadd.xlane.f32.xlu0 %v419
    %v421 = vpop.xlane.xlu0 %420
    %v422 = vsel %vm91, %v404, 0.0
    %423 = vadd.xlane.f32.xlu0 %v422
    %v424 = vpop.xlane.xlu0 %423
    %v425 = vsel %vm91, %v405, 0.0
    %426 = vadd.xlane.f32.xlu0 %v425
    %v427 = vpop.xlane.xlu0 %426
    %v428 = vsel %vm91, %v406, 0.0
    %429 = vadd.xlane.f32.xlu0 %v428
    %v430 = vpop.xlane.xlu0 %429
    %v439 = vlaneseq
    %v440 = vand.u32 %v439, 127
    %v441 = vlaneseq
    %v442 = vshrl.u32 %v441, 7
    %v443 = vsub.s32 %v440, %v442
    %v444 = vrot.slane %v409, %v443
    %v445 = vlaneseq
    %v446 = vshrl.u32 %v445, 7
    %v447 = vsub.s32 %v440, %v446
    %v448 = vrot.slane %v412, %v447
    %v449 = vlaneseq
    %v450 = vshrl.u32 %v449, 7
    %v451 = vsub.s32 %v440, %v450
    %v452 = vrot.slane %v415, %v451
    %v453 = vlaneseq
    %v454 = vshrl.u32 %v453, 7
    %v455 = vsub.s32 %v440, %v454
    %v456 = vrot.slane %v418, %v455
    %v457 = vlaneseq
    %v458 = vshrl.u32 %v457, 7
    %v459 = vsub.s32 %v440, %v458
    %v460 = vrot.slane %v421, %v459
    %v461 = vlaneseq
    %v462 = vshrl.u32 %v461, 7
    %v463 = vsub.s32 %v440, %v462
    %v464 = vrot.slane %v424, %v463
    %v465 = vlaneseq
    %v466 = vshrl.u32 %v465, 7
    %v467 = vsub.s32 %v440, %v466
    %v468 = vrot.slane %v427, %v467
    %v469 = vlaneseq
    %v470 = vshrl.u32 %v469, 7
    %v471 = vsub.s32 %v440, %v470
    %v472 = vrot.slane %v430, %v471
    %vm473 = vcmask 1041409
    %v474 = vsel %vm473, %v448, %v444
    %vm475 = vcmask 1042434
    %v476 = vsel %vm475, %v452, %v474
    %vm477 = vcmask 1043459
    %v478 = vsel %vm477, %v456, %v476
    %vm479 = vcmask 1044484
    %v480 = vsel %vm479, %v460, %v478
    %vm481 = vcmask 1045509
    %v482 = vsel %vm481, %v464, %v480
    %vm483 = vcmask 1046534
    %v484 = vsel %vm483, %v468, %v482
    %vm485 = vcmask 1047559
    %v486 = vsel %vm485, %v472, %v484
    %vm488 = vcmask 64512
    %489 = vst.msk [vmem:[#allocation10] sm:$0xff] %vm488, %v486
    // Predicated region
    $region38: #{tpu_custom_call.1} parent=1 // pred_check
      _
    $region39: #{tpu_custom_call.1} parent=1 // pred_check_branch
      %491 = sbr.rel (0) target = $region41
    $region40: #{tpu_custom_call.1} parent=1 // pred_region
      %s493 = ssub.s32 128, 128
      %494 = vsyncadd [#allocation4], %s493
      %s496 = sshll.u32 [#allocation10], 4
      %s497 = int_to_ptr.vmem [resolvable:$true] %s496
      %499 = dma.vmem_to_hbm [thread:$0]  %s497, 128, %s5, [#allocation4]
    $region41: #{tpu_custom_call.1} parent=1 // pred_fallthru
      _
    // Predicated region
    $region42: #{tpu_custom_call.1} parent=1 // pred_check
      _
    $region43: #{tpu_custom_call.1} parent=1 // pred_check_branch
      %501 = sbr.rel (0) target = $region45
    $region44: #{tpu_custom_call.1} parent=1 // pred_region
      %502 = dma.done [#allocation4], 128
    $region45: #{tpu_custom_call.1} parent=1 // pred_fallthru
      _
    %503 = vsyncpa [#allocation3], 1
    %504 = vsyncpa [#allocation6], 1
    %505 = vsyncpa [#allocation9], 1
    %506 = vsyncpa [#allocation4], 1

</llo_original>
